<compile_context>
chip_gen: v7x
topology: tpu7x:2x2x1
jax: 0.10.0
libtpu: 0.0.40
codegen_flags: <defaults>
</compile_context>

<pallas_src>
import math
from typing import NamedTuple

import jax
import jax.numpy as jnp
from jax.experimental import pallas as pl
from jax.experimental.pallas import tpu as pltpu

_INV_SQRT2 = 0.7071067811865476  # 1/sqrt(2)


# --------------------------------------------------------------------------
# Helpers
# --------------------------------------------------------------------------
def _round_up(x, m):
    return ((x + m - 1) // m) * m


def _vmem_capacity_bytes():
    """Per-core VMEM capacity (bytes); conservative 64 MiB fallback."""
    try:
        return int(pltpu.get_tpu_info().vmem_capacity_bytes)
    except Exception:
        pass
    try:
        kind = jax.devices()[0].device_kind.lower()
        if "v7" in kind:
            return 64 << 20
        return 128 << 20            # v5e / v6e have 128 MiB physical VMEM
    except Exception:
        return 64 << 20


def _is_v7x():
    try:
        return "v7" in jax.devices()[0].device_kind.lower()
    except Exception:
        return False


def _working_set_bytes(tt, ht, C, O_pad, out_bytes, use_acc_scratch):
    """Estimated VMEM working set for one (token_tile, hidden_tile) choice."""
    ws = (2 * tt * C * 4                  # x tiles (<=f32, double-buffered)
          + 2 * C * ht * 2                # W1 tiles (bf16, double-buffered)
          + 2 * ht * O_pad * 2            # W2 tiles (bf16, double-buffered)
          + 2 * 8 * ht * 4                # b1 tiles (sublane-padded f32)
          + 2 * 8 * (2 * C + O_pad) * 4   # gamma / beta / b2 tiles
          + 2 * tt * O_pad * out_bytes    # output tiles (double-buffered)
          + tt * C * 2                    # cached layernorm scratch (bf16)
          + tt * ht * 4)                  # fc1 intermediate headroom
    if use_acc_scratch:
        ws += tt * O_pad * 4              # f32 accumulator scratch
    return ws


def _select_tiles(T, C, H_pad, O_pad, out_bytes, use_acc_scratch, budget,
                  token_tile=None, hidden_tile=None):
    t_cap = max(8, _round_up(T, 8))
    tt_base = (1024, 768, 512, 384, 256, 128)
    tt_cands = sorted({min(c, t_cap) for c in tt_base}, reverse=True)
    ht_cands = [H_pad] + [c for c in (4096, 2048, 1024, 512, 256, 128)
                          if c < H_pad and H_pad % c == 0]

    def fits(tt, ht):
        return _working_set_bytes(tt, ht, C, O_pad, out_bytes,
                                  use_acc_scratch) <= budget

    if token_tile is not None and hidden_tile is not None:
        return token_tile, hidden_tile
    if token_tile is not None:
        for ht in ht_cands:
            if fits(token_tile, ht):
                return token_tile, ht
        return token_tile, min(ht_cands)
    if hidden_tile is not None:
        for tt in tt_cands:
            if fits(tt, hidden_tile):
                return tt, hidden_tile
        return tt_cands[-1], hidden_tile

    # Pass A: weights fully VMEM-resident (hidden_tile == H_pad).  Constant
    # weight index_maps -> W1/W2 are DMA'd exactly once for the whole grid.
    for tt in tt_cands:
        if fits(tt, H_pad):
            return tt, H_pad
    # Pass B: stream weight tiles once per token tile.  Weight arithmetic
    # intensity ~= token_tile FLOP/byte -> maximize token_tile first.
    for tt in tt_cands:
        for ht in ht_cands[1:]:
            if fits(tt, ht):
                return tt, ht
    # Fallback: smallest combo (the compiler may still fit it).
    return tt_cands[-1], min(ht_cands)


# --------------------------------------------------------------------------
# Kernel
# --------------------------------------------------------------------------
def _make_mlp_kernel(acc_in_out):
    """acc_in_out=True: accumulate fc2 directly into the f32 output block."""

    def kernel(x_ref, g_ref, b_ref, w1_ref, b1_ref, w2_ref, b2_ref,
               o_ref, xn_ref, *scratch):
        acc_ref = o_ref if acc_in_out else scratch[0]
        hk = pl.program_id(1)

        # LayerNorm once per token tile (first hidden step); cache the
        # normalized activations in a bf16 VMEM scratch for reuse across hk.
        @pl.when(hk == 0)
        def _():
            x = x_ref[...].astype(jnp.float32)
            mean = jnp.mean(x, axis=-1, keepdims=True)
            cen = x - mean
            var = jnp.mean(cen * cen, axis=-1, keepdims=True)  # two-pass: safe
            xn = cen * jax.lax.rsqrt(var + jnp.float32(1e-5))
            xn = xn * g_ref[...] + b_ref[...]
            xn_ref[...] = xn.astype(xn_ref.dtype)
            acc_ref[...] = jnp.zeros_like(acc_ref)

        # fc1 slice: bf16 MXU inputs, f32 accumulation; exact-erf GELU in f32
        # (matches nn.GELU default; tanh-approx deliberately not used).
        h = jnp.dot(xn_ref[...], w1_ref[...],
                    preferred_element_type=jnp.float32)
        h = h + b1_ref[...]
        h = 0.5 * h * (1.0 + jax.lax.erf(h * jnp.float32(_INV_SQRT2)))

        # fc2 slice, accumulated across hidden tiles (into o_ref when f32).
        acc_ref[...] += jnp.dot(h.astype(jnp.bfloat16), w2_ref[...],
                                preferred_element_type=jnp.float32)

        @pl.when(hk == pl.num_programs(1) - 1)
        def _():
            o_ref[...] = (acc_ref[...] + b2_ref[...]).astype(o_ref.dtype)

    return kernel


# --------------------------------------------------------------------------
# Parameter prep (one-time; hoisted out of the per-call path)
# --------------------------------------------------------------------------
class MlpPreparedParams(NamedTuple):
    gamma: jax.Array   # (1, C) f32
    beta: jax.Array    # (1, C) f32
    w1: jax.Array      # (C, H_pad) bf16
    b1: jax.Array      # (1, H_pad) f32
    w2: jax.Array      # (H_pad, O_pad) bf16
    b2: jax.Array      # (1, O_pad) f32
    out_features: int


def prepare_mlp_params(gamma, beta, w1, b1, w2, b2):
    C, H = w1.shape
    O = w2.shape[1]
    H_pad = _round_up(H, 128)
    O_pad = _round_up(O, 128)
    g2 = gamma.reshape(1, C).astype(jnp.float32)
    be2 = beta.reshape(1, C).astype(jnp.float32)
    w1p = jnp.pad(w1, ((0, 0), (0, H_pad - H))).astype(jnp.bfloat16)
    w2p = jnp.pad(w2, ((0, H_pad - H), (0, O_pad - O))).astype(jnp.bfloat16)
    b1p = jnp.pad(b1, (0, H_pad - H)).reshape(1, H_pad).astype(jnp.float32)
    b2p = jnp.pad(b2, (0, O_pad - O)).reshape(1, O_pad).astype(jnp.float32)
    return MlpPreparedParams(g2, be2, w1p, b1p, w2p, b2p, int(O))


# --------------------------------------------------------------------------
# Wrapper
# --------------------------------------------------------------------------
def mlp_pallas_prepared(x, prep, *, token_tile=None, hidden_tile=None):
    """x: [..., C]. prep: MlpPreparedParams. Returns [..., out_features]."""
    orig_shape = x.shape
    C = orig_shape[-1]
    T = int(math.prod(orig_shape[:-1]))
    H_pad = prep.w1.shape[1]
    O_pad = prep.w2.shape[1]
    O = prep.out_features
    assert prep.w1.shape[0] == C

    out_dtype = x.dtype
    out_bytes = jnp.dtype(out_dtype).itemsize
    # Accumulate directly into the VMEM-resident output block when it is f32;
    # otherwise keep a separate f32 scratch accumulator.
    acc_in_out = jnp.dtype(out_dtype) == jnp.dtype(jnp.float32)
    use_acc_scratch = not acc_in_out

    vmem_cap = _vmem_capacity_bytes()
    vmem_usable = vmem_cap - (8 << 20)          # headroom for compiler scratch
    budget = int(vmem_usable * 0.85)            # tile working-set target

    auto_tt = token_tile is None
    token_tile, hidden_tile = _select_tiles(
        T, C, H_pad, O_pad, out_bytes, use_acc_scratch, budget,
        token_tile=token_tile, hidden_tile=hidden_tile)

    # v7x has 2 TensorCores: make sure the "parallel" token axis has >= 2
    # blocks so both cores get work.
    if auto_tt and _is_v7x() and T > 8 and _round_up(T, token_tile) == token_tile:
        token_tile = _round_up((T + 1) // 2, 8)

    assert H_pad % hidden_tile == 0
    T_pad = _round_up(T, token_tile)

    x2 = x.reshape(T, C)
    if T_pad != T:
        # Zero pad rows: layernorm of zeros is finite (var + eps > 0); the
        # pad rows are sliced away below.
        x2 = jnp.pad(x2, ((0, T_pad - T), (0, 0)))

    nT = T_pad // token_tile
    nH = H_pad // hidden_tile
    grid = (nT, nH)

    # Advisory cost estimate: weights are re-streamed per token tile only
    # when nH > 1 (otherwise their index_map is constant -> fetched once).
    weight_streams = nT if nH > 1 else 1
    cost = pl.CostEstimate(
        flops=int(2 * T_pad * C * H_pad + 2 * T_pad * H_pad * O_pad),
        transcendentals=int(T_pad * H_pad),
        bytes_accessed=int(
            T_pad * C * x2.dtype.itemsize
            + weight_streams * (prep.w1.size + prep.w2.size) * 2
            + (prep.gamma.size + prep.beta.size
               + prep.b1.size + prep.b2.size) * 4
            + T_pad * O_pad * out_bytes),
    )

    ws = _working_set_bytes(token_tile, hidden_tile, C, O_pad, out_bytes,
                            use_acc_scratch)
    vmem_limit = int(max(16 << 20, min(vmem_usable, int(ws * 1.4))))

    scratch_shapes = [pltpu.VMEM((token_tile, C), jnp.bfloat16)]  # cached LN
    if use_acc_scratch:
        scratch_shapes.append(pltpu.VMEM((token_tile, O_pad), jnp.float32))

    out = pl.pallas_call(
        _make_mlp_kernel(acc_in_out),
        out_shape=jax.ShapeDtypeStruct((T_pad, O_pad), out_dtype),
        grid_spec=pltpu.PrefetchScalarGridSpec(
            num_scalar_prefetch=0,
            grid=grid,
            in_specs=[
                pl.BlockSpec((token_tile, C), lambda i, hk: (i, 0)),       # x
                pl.BlockSpec((1, C), lambda i, hk: (0, 0)),                # gamma
                pl.BlockSpec((1, C), lambda i, hk: (0, 0)),                # beta
                pl.BlockSpec((C, hidden_tile), lambda i, hk: (0, hk)),     # W1
                pl.BlockSpec((1, hidden_tile), lambda i, hk: (0, hk)),     # b1
                pl.BlockSpec((hidden_tile, O_pad), lambda i, hk: (hk, 0)),  # W2
                pl.BlockSpec((1, O_pad), lambda i, hk: (0, 0)),            # b2
            ],
            out_specs=pl.BlockSpec((token_tile, O_pad), lambda i, hk: (i, 0)),
            scratch_shapes=scratch_shapes,
        ),
        compiler_params=pltpu.CompilerParams(
            dimension_semantics=("parallel", "arbitrary"),
            vmem_limit_bytes=vmem_limit,
        ),
        cost_estimate=cost,
    )(x2, prep.gamma, prep.beta, prep.w1, prep.b1, prep.w2, prep.b2)

    out = out[:T, :O]
    return out.reshape(*orig_shape[:-1], O)


def mlp_pallas(x, gamma, beta, w1, b1, w2, b2, *, token_tile=None,
               hidden_tile=None):
    """Convenience path: prep + kernel.  Prefer prepare_mlp_params() once +
    mlp_pallas_prepared() per call to avoid re-padding/casting the weights."""
    prep = prepare_mlp_params(gamma, beta, w1, b1, w2, b2)
    return mlp_pallas_prepared(x, prep, token_tile=token_tile,
                               hidden_tile=hidden_tile)


# --------------------------------------------------------------------------
# Reference / init / test
# --------------------------------------------------------------------------
def init_mlp_params(key, in_features, hidden_features, out_features):
    """Deterministic init mirroring nn.Linear / nn.LayerNorm shapes."""
    k1, k2, k3, k4 = jax.random.split(key, 4)
    gamma = jnp.ones((in_features,), jnp.float32)
    beta = jnp.zeros((in_features,), jnp.float32)
    lim1 = 1.0 / math.sqrt(in_features)
    w1 = jax.random.uniform(k1, (in_features, hidden_features), jnp.float32,
                            -lim1, lim1)
    b1 = jax.random.uniform(k2, (hidden_features,), jnp.float32, -lim1, lim1)
    lim2 = 1.0 / math.sqrt(hidden_features)
    w2 = jax.random.uniform(k3, (hidden_features, out_features), jnp.float32,
                            -lim2, lim2)
    b2 = jax.random.uniform(k4, (out_features,), jnp.float32, -lim2, lim2)
    return gamma, beta, w1, b1, w2, b2


def mlp_reference(x, gamma, beta, w1, b1, w2, b2):
    """Pure-JAX f32 reference for correctness checking."""
    mean = jnp.mean(x, axis=-1, keepdims=True)
    var = jnp.mean((x - mean) ** 2, axis=-1, keepdims=True)
    xn = (x - mean) / jnp.sqrt(var + 1e-5) * gamma + beta
    h = xn @ w1 + b1
    h = 0.5 * h * (1.0 + jax.lax.erf(h / jnp.sqrt(2.0)))
    return h @ w2 + b2


if __name__ == "__main__":
    B, N = 2, 8            # batch, sequence
    in_features = 32
    hidden_features = 64
    out_features = 32

    key = jax.random.PRNGKey(0)
    kx, kp = jax.random.split(key)
    x = jax.random.normal(kx, (B, N, in_features), jnp.float32)
    params = init_mlp_params(kp, in_features, hidden_features, out_features)

    # One-time weight prep (pad + bf16 cast), then the kernel call.
    prep = prepare_mlp_params(*params)
    out = mlp_pallas_prepared(x, prep)
    out = jax.block_until_ready(out)

    ref = mlp_reference(x, *params)
    assert out.shape == (B, N, out_features)
    # bf16 MXU inputs -> ~1e-2 relative tolerance vs the f32 reference.
    max_err = float(jnp.max(jnp.abs(out - ref)))
    assert jnp.allclose(out, ref, atol=3e-2, rtol=3e-2), (
        f"mismatch vs reference (max abs err {max_err})")

    print("KERNEL_OK")
</pallas_src>

<mosaic_0001>
module attributes {stable_mosaic.version = 11 : i64} {
  func.func @kernel(%arg0: i32, %arg1: i32, %arg2: memref<16x32xf32, #tpu.memory_space<vmem>>, %arg3: memref<1x32xf32, #tpu.memory_space<vmem>>, %arg4: memref<1x32xf32, #tpu.memory_space<vmem>>, %arg5: memref<32x128xbf16, #tpu.memory_space<vmem>>, %arg6: memref<1x128xf32, #tpu.memory_space<vmem>>, %arg7: memref<128x128xbf16, #tpu.memory_space<vmem>>, %arg8: memref<1x128xf32, #tpu.memory_space<vmem>>, %arg9: memref<16x128xf32, #tpu.memory_space<vmem>>, %arg10: memref<16x32xbf16, #tpu.memory_space<vmem>>) attributes {dimension_semantics = [#tpu.dimension_semantics<parallel>, #tpu.dimension_semantics<arbitrary>], iteration_bounds = array<i64: 1, 1>, scalar_prefetch = 0 : i64, scratch_operands = 1 : i64, tpu.core_type = #tpu.core_type<tc>, window_params = [{transform_indices = @transform_0, window_bounds = array<i64: 16, 32>}, {pipeline_mode = #tpu.pipeline_mode<synchronous>, transform_indices = @transform_1, window_bounds = array<i64: 1, 32>}, {pipeline_mode = #tpu.pipeline_mode<synchronous>, transform_indices = @transform_2, window_bounds = array<i64: 1, 32>}, {transform_indices = @transform_3, window_bounds = array<i64: 32, 128>}, {transform_indices = @transform_4, window_bounds = array<i64: 1, 128>}, {transform_indices = @transform_5, window_bounds = array<i64: 128, 128>}, {pipeline_mode = #tpu.pipeline_mode<synchronous>, transform_indices = @transform_6, window_bounds = array<i64: 1, 128>}, {transform_indices = @transform_7, window_bounds = array<i64: 16, 128>}]} {
    %c0_i32 = arith.constant 0 : i32
    %0 = arith.cmpi eq, %arg1, %c0_i32 : i32
    %1 = arith.extui %0 : i1 to i32
    %c0_i32_0 = arith.constant 0 : i32
    %2 = arith.cmpi ne, %1, %c0_i32_0 : i32
    scf.if %2 {
      %c0_18 = arith.constant 0 : index
      %c0_19 = arith.constant 0 : index
      %26 = vector.load %arg2[%c0_18, %c0_19] : memref<16x32xf32, #tpu.memory_space<vmem>>, vector<16x32xf32>
      %cst_20 = arith.constant dense<0.000000e+00> : vector<16xf32>
      %27 = vector.multi_reduction <add>, %26, %cst_20 [1] : vector<16x32xf32> to vector<16xf32>
      %28 = vector.shape_cast %27 : vector<16xf32> to vector<16x1xf32>
      %cst_21 = arith.constant 3.200000e+01 : f32
      %29 = vector.broadcast %cst_21 : f32 to vector<16x1xf32>
      %30 = arith.divf %28, %29 : vector<16x1xf32>
      %31 = vector.broadcast %30 : vector<16x1xf32> to vector<16x32xf32>
      %32 = arith.subf %26, %31 : vector<16x32xf32>
      %33 = arith.mulf %32, %32 : vector<16x32xf32>
      %cst_22 = arith.constant dense<0.000000e+00> : vector<16xf32>
      %34 = vector.multi_reduction <add>, %33, %cst_22 [1] : vector<16x32xf32> to vector<16xf32>
      %35 = vector.shape_cast %34 : vector<16xf32> to vector<16x1xf32>
      %cst_23 = arith.constant 3.200000e+01 : f32
      %36 = vector.broadcast %cst_23 : f32 to vector<16x1xf32>
      %37 = arith.divf %35, %36 : vector<16x1xf32>
      %cst_24 = arith.constant 9.99999974E-6 : f32
      %38 = vector.broadcast %cst_24 : f32 to vector<16x1xf32>
      %39 = arith.addf %37, %38 : vector<16x1xf32>
      %40 = math.rsqrt %39 : vector<16x1xf32>
      %41 = vector.broadcast %40 : vector<16x1xf32> to vector<16x32xf32>
      %42 = arith.mulf %32, %41 : vector<16x32xf32>
      %c0_25 = arith.constant 0 : index
      %c0_26 = arith.constant 0 : index
      %43 = vector.load %arg3[%c0_25, %c0_26] : memref<1x32xf32, #tpu.memory_space<vmem>>, vector<1x32xf32>
      %44 = vector.broadcast %43 : vector<1x32xf32> to vector<16x32xf32>
      %45 = arith.mulf %42, %44 : vector<16x32xf32>
      %c0_27 = arith.constant 0 : index
      %c0_28 = arith.constant 0 : index
      %46 = vector.load %arg4[%c0_27, %c0_28] : memref<1x32xf32, #tpu.memory_space<vmem>>, vector<1x32xf32>
      %47 = vector.broadcast %46 : vector<1x32xf32> to vector<16x32xf32>
      %48 = arith.addf %45, %47 : vector<16x32xf32>
      %49 = arith.truncf %48 : vector<16x32xf32> to vector<16x32xbf16>
      %c0_29 = arith.constant 0 : index
      %c0_30 = arith.constant 0 : index
      %50 = vector.load %arg10[%c0_29, %c0_30] : memref<16x32xbf16, #tpu.memory_space<vmem>>, vector<16x32xbf16>
      tpu.vector_store %arg10[%c0_29, %c0_30], %49 {strides = array<i32>} : memref<16x32xbf16, #tpu.memory_space<vmem>>, vector<16x32xbf16>,
      %cst_31 = arith.constant 0.000000e+00 : f32
      %51 = vector.broadcast %cst_31 : f32 to vector<16x128xf32>
      %c0_32 = arith.constant 0 : index
      %c0_33 = arith.constant 0 : index
      %52 = vector.load %arg9[%c0_32, %c0_33] : memref<16x128xf32, #tpu.memory_space<vmem>>, vector<16x128xf32>
      tpu.vector_store %arg9[%c0_32, %c0_33], %51 {strides = array<i32>} : memref<16x128xf32, #tpu.memory_space<vmem>>, vector<16x128xf32>,
    } else {
    }
    %c0 = arith.constant 0 : index
    %c0_1 = arith.constant 0 : index
    %3 = vector.load %arg10[%c0, %c0_1] : memref<16x32xbf16, #tpu.memory_space<vmem>>, vector<16x32xbf16>
    %c0_2 = arith.constant 0 : index
    %c0_3 = arith.constant 0 : index
    %4 = vector.load %arg5[%c0_2, %c0_3] : memref<32x128xbf16, #tpu.memory_space<vmem>>, vector<32x128xbf16>
    %cst = arith.constant dense<0.000000e+00> : vector<16x128xf32>
    %5 = tpu.matmul %3, %4, %cst {dimension_numbers = #tpu.dot_dimension_numbers<[1], [0], [0], [1], [0, 0, 1, 1], [], []>} : vector<16x32xbf16>, vector<32x128xbf16>, vector<16x128xf32> -> vector<16x128xf32>
    %c0_4 = arith.constant 0 : index
    %c0_5 = arith.constant 0 : index
    %6 = vector.load %arg6[%c0_4, %c0_5] : memref<1x128xf32, #tpu.memory_space<vmem>>, vector<1x128xf32>
    %7 = vector.broadcast %6 : vector<1x128xf32> to vector<16x128xf32>
    %8 = arith.addf %5, %7 : vector<16x128xf32>
    %cst_6 = arith.constant 5.000000e-01 : f32
    %9 = vector.broadcast %cst_6 : f32 to vector<16x128xf32>
    %10 = arith.mulf %9, %8 : vector<16x128xf32>
    %cst_7 = arith.constant 0.707106769 : f32
    %11 = vector.broadcast %cst_7 : f32 to vector<16x128xf32>
    %12 = arith.mulf %8, %11 : vector<16x128xf32>
    %13 = math.erf %12 : vector<16x128xf32>
    %cst_8 = arith.constant 1.000000e+00 : f32
    %14 = vector.broadcast %cst_8 : f32 to vector<16x128xf32>
    %15 = arith.addf %14, %13 : vector<16x128xf32>
    %16 = arith.mulf %10, %15 : vector<16x128xf32>
    %c0_9 = arith.constant 0 : index
    %c0_10 = arith.constant 0 : index
    %17 = vector.load %arg9[%c0_9, %c0_10] : memref<16x128xf32, #tpu.memory_space<vmem>>, vector<16x128xf32>
    %18 = arith.truncf %16 : vector<16x128xf32> to vector<16x128xbf16>
    %c0_11 = arith.constant 0 : index
    %c0_12 = arith.constant 0 : index
    %19 = vector.load %arg7[%c0_11, %c0_12] : memref<128x128xbf16, #tpu.memory_space<vmem>>, vector<128x128xbf16>
    %cst_13 = arith.constant dense<0.000000e+00> : vector<16x128xf32>
    %20 = tpu.matmul %18, %19, %cst_13 {dimension_numbers = #tpu.dot_dimension_numbers<[1], [0], [0], [1], [0, 0, 1, 1], [], []>} : vector<16x128xbf16>, vector<128x128xbf16>, vector<16x128xf32> -> vector<16x128xf32>
    %21 = arith.addf %17, %20 : vector<16x128xf32>
    %c0_14 = arith.constant 0 : index
    %c0_15 = arith.constant 0 : index
    %22 = vector.load %arg9[%c0_14, %c0_15] : memref<16x128xf32, #tpu.memory_space<vmem>>, vector<16x128xf32>
    tpu.vector_store %arg9[%c0_14, %c0_15], %21 {strides = array<i32>} : memref<16x128xf32, #tpu.memory_space<vmem>>, vector<16x128xf32>,
    %c0_i32_16 = arith.constant 0 : i32
    %23 = arith.cmpi eq, %arg1, %c0_i32_16 : i32
    %24 = arith.extui %23 : i1 to i32
    %c0_i32_17 = arith.constant 0 : i32
    %25 = arith.cmpi ne, %24, %c0_i32_17 : i32
    scf.if %25 {
      %c0_18 = arith.constant 0 : index
      %c0_19 = arith.constant 0 : index
      %26 = vector.load %arg9[%c0_18, %c0_19] : memref<16x128xf32, #tpu.memory_space<vmem>>, vector<16x128xf32>
      %c0_20 = arith.constant 0 : index
      %c0_21 = arith.constant 0 : index
      %27 = vector.load %arg8[%c0_20, %c0_21] : memref<1x128xf32, #tpu.memory_space<vmem>>, vector<1x128xf32>
      %28 = vector.broadcast %27 : vector<1x128xf32> to vector<16x128xf32>
      %29 = arith.addf %26, %28 : vector<16x128xf32>
      %c0_22 = arith.constant 0 : index
      %c0_23 = arith.constant 0 : index
      %30 = vector.load %arg9[%c0_22, %c0_23] : memref<16x128xf32, #tpu.memory_space<vmem>>, vector<16x128xf32>
      tpu.vector_store %arg9[%c0_22, %c0_23], %29 {strides = array<i32>} : memref<16x128xf32, #tpu.memory_space<vmem>>, vector<16x128xf32>,
    } else {
    }
    return
  }
  func.func @transform_0(%arg0: i32, %arg1: i32) -> (i32, i32) {
    %c0_i32 = arith.constant 0 : i32
    %c0_i32_0 = arith.constant 0 : i32
    return %arg0, %c0_i32 : i32, i32
  }
  func.func @transform_1(%arg0: i32, %arg1: i32) -> (i32, i32) {
    %c0_i32 = arith.constant 0 : i32
    %c0_i32_0 = arith.constant 0 : i32
    %c0_i32_1 = arith.constant 0 : i32
    return %c0_i32, %c0_i32_0 : i32, i32
  }
  func.func @transform_2(%arg0: i32, %arg1: i32) -> (i32, i32) {
    %c0_i32 = arith.constant 0 : i32
    %c0_i32_0 = arith.constant 0 : i32
    %c0_i32_1 = arith.constant 0 : i32
    return %c0_i32, %c0_i32_0 : i32, i32
  }
  func.func @transform_3(%arg0: i32, %arg1: i32) -> (i32, i32) {
    %c0_i32 = arith.constant 0 : i32
    %c0_i32_0 = arith.constant 0 : i32
    return %c0_i32, %arg1 : i32, i32
  }
  func.func @transform_4(%arg0: i32, %arg1: i32) -> (i32, i32) {
    %c0_i32 = arith.constant 0 : i32
    %c0_i32_0 = arith.constant 0 : i32
    return %c0_i32, %arg1 : i32, i32
  }
  func.func @transform_5(%arg0: i32, %arg1: i32) -> (i32, i32) {
    %c0_i32 = arith.constant 0 : i32
    %c0_i32_0 = arith.constant 0 : i32
    return %arg1, %c0_i32 : i32, i32
  }
  func.func @transform_6(%arg0: i32, %arg1: i32) -> (i32, i32) {
    %c0_i32 = arith.constant 0 : i32
    %c0_i32_0 = arith.constant 0 : i32
    %c0_i32_1 = arith.constant 0 : i32
    return %c0_i32, %c0_i32_0 : i32, i32
  }
  func.func @transform_7(%arg0: i32, %arg1: i32) -> (i32, i32) {
    %c0_i32 = arith.constant 0 : i32
    %c0_i32_0 = arith.constant 0 : i32
    return %arg0, %c0_i32 : i32, i32
  }
}

</mosaic_0001>

<llo_original>
// kernel: tpu_custom_call.1
$region0: #{tpu_custom_call.1}
  #allocation0 [shape = 'u32[]', space=smem, size = 0x4, offset = 0x4, fixed_abs, tag = 'smem constant byte address 0x4 - core index']
  #allocation1 [shape = 'u32[144,128]{1,0:T(1,128)}', space=vmem, size = 0x12000, scoped, tag = 'internal scratch']
  #allocation2 [shape = 'bf16[16,32]{1,0:T(16,128)(2,1)}', space=vmem, size = 0x1000, scoped, tag = 'scratch operand']
  %s0 = inlined_call_operand.hbm [shape: f32[16,32], index: 0, kind: input, shape index: {}]
  %s1 = inlined_call_operand.vmem [shape: f32[1,32], index: 1, kind: input, shape index: {}]
  %s2 = inlined_call_operand.vmem [shape: f32[1,32], index: 2, kind: input, shape index: {}]
  %s3 = inlined_call_operand.hbm [shape: bf16[32,128], index: 3, kind: input, shape index: {}]
  %s4 = inlined_call_operand.vmem [shape: f32[1,128], index: 4, kind: input, shape index: {}]
  %s5 = inlined_call_operand.hbm [shape: bf16[128,128], index: 5, kind: input, shape index: {}]
  %s6 = inlined_call_operand.vmem [shape: f32[1,128], index: 6, kind: input, shape index: {}]
  %s7 = inlined_call_operand.hbm [shape: f32[16,128], index: 7, kind: output, shape index: {}]
  %s8 = sld [smem:[#allocation0]]
  $region58: #{tpu_custom_call.1} parent=0
    _
  %s10 = ssub.s32 1, %s8
  %s11 = scalar_select 0, %s10, %s8
  $region1: #{tpu_custom_call.1} parent=0
    #allocation3 [shape = 'u8[8192]{0}', space=vmem, size = 0x2000, scoped, tag = 'input window, operand 0, single buffered']
    #allocation4 [shape = 's32[1]{0}', space=sflag, size = 0x4, scoped, tag = 'scoped memory for tpu_custom_call.1']
    #allocation5 [shape = 's32[1]{0}', space=sflag, size = 0x4, scoped, tag = 'scoped memory for tpu_custom_call.1']
    #allocation6 [shape = 'u8[8192]{0}', space=vmem, size = 0x2000, scoped, tag = 'input window, operand 3, single buffered']
    #allocation7 [shape = 's32[1]{0}', space=sflag, size = 0x4, scoped, tag = 'scoped memory for tpu_custom_call.1']
    #allocation8 [shape = 'u8[32768]{0}', space=vmem, size = 0x8000, scoped, tag = 'input window, operand 5, single buffered']
    #allocation9 [shape = 'u8[8192]{0}', space=vmem, size = 0x2000, scoped, tag = 'output window, operand 0, single buffered']
    %12 = vsyncpa [#allocation4], 0
    %13 = vsyncpa [#allocation7], 0
    %14 = vsyncpa [#allocation5], 0
    // Predicated region
    $region2: #{tpu_custom_call.1} parent=1 // pred_check
      _
    $region3: #{tpu_custom_call.1} parent=1 // pred_check_branch
      %16 = sbr.rel (0) target = $region5
    $region4: #{tpu_custom_call.1} parent=1 // pred_region
      %s18 = ssub.s32 256, 256
      %19 = vsyncadd [#allocation4], %s18
      %s20 = sshll.u32 [#allocation3], 4
      %s21 = int_to_ptr.vmem [resolvable:$true] %s20
      %26 = dma.hbm_to_vmem [thread:$0]  %s0, 256, %s21, [#allocation4], 128, 128, 8
    $region5: #{tpu_custom_call.1} parent=1 // pred_fallthru
      _
    // Predicated region
    $region6: #{tpu_custom_call.1} parent=1 // pred_check
      _
    $region7: #{tpu_custom_call.1} parent=1 // pred_check_branch
      %28 = sbr.rel (0) target = $region9
    $region8: #{tpu_custom_call.1} parent=1 // pred_region
      _
    $region9: #{tpu_custom_call.1} parent=1 // pred_fallthru
      _
    // Predicated region
    $region10: #{tpu_custom_call.1} parent=1 // pred_check
      _
    $region11: #{tpu_custom_call.1} parent=1 // pred_check_branch
      %30 = sbr.rel (0) target = $region13
    $region12: #{tpu_custom_call.1} parent=1 // pred_region
      _
    $region13: #{tpu_custom_call.1} parent=1 // pred_fallthru
      _
    // Predicated region
    $region14: #{tpu_custom_call.1} parent=1 // pred_check
      _
    $region15: #{tpu_custom_call.1} parent=1 // pred_check_branch
      %32 = sbr.rel (0) target = $region17
    $region16: #{tpu_custom_call.1} parent=1 // pred_region
      %s34 = ssub.s32 256, 256
      %35 = vsyncadd [#allocation7], %s34
      %s36 = sshll.u32 [#allocation6], 4
      %s37 = int_to_ptr.vmem [resolvable:$true] %s36
      %42 = dma.hbm_to_vmem [thread:$0]  %s3, 256, %s37, [#allocation7], 64, 64, 4
    $region17: #{tpu_custom_call.1} parent=1 // pred_fallthru
      _
    // Predicated region
    $region18: #{tpu_custom_call.1} parent=1 // pred_check
      _
    $region19: #{tpu_custom_call.1} parent=1 // pred_check_branch
      %44 = sbr.rel (0) target = $region21
    $region20: #{tpu_custom_call.1} parent=1 // pred_region
      _
    $region21: #{tpu_custom_call.1} parent=1 // pred_fallthru
      _
    // Predicated region
    $region22: #{tpu_custom_call.1} parent=1 // pred_check
      _
    $region23: #{tpu_custom_call.1} parent=1 // pred_check_branch
      %46 = sbr.rel (0) target = $region25
    $region24: #{tpu_custom_call.1} parent=1 // pred_region
      %s48 = ssub.s32 1024, 1024
      %49 = vsyncadd [#allocation7], %s48
      %s50 = sshll.u32 [#allocation8], 4
      %s51 = int_to_ptr.vmem [resolvable:$true] %s50
      %56 = dma.hbm_to_vmem [thread:$0]  %s5, 1024, %s51, [#allocation7], 64, 64, 4
    $region25: #{tpu_custom_call.1} parent=1 // pred_fallthru
      _
    // Predicated region
    $region26: #{tpu_custom_call.1} parent=1 // pred_check
      _
    $region27: #{tpu_custom_call.1} parent=1 // pred_check_branch
      %58 = sbr.rel (0) target = $region29
    $region28: #{tpu_custom_call.1} parent=1 // pred_region
      _
    $region29: #{tpu_custom_call.1} parent=1 // pred_fallthru
      _
    // Predicated region
    $region30: #{tpu_custom_call.1} parent=1 // pred_check
      _
    $region31: #{tpu_custom_call.1} parent=1 // pred_check_branch
      %60 = sbr.rel (0) target = $region33
    $region32: #{tpu_custom_call.1} parent=1 // pred_region
      %61 = dma.done [#allocation4], 256
    $region33: #{tpu_custom_call.1} parent=1 // pred_fallthru
      _
    // Predicated region
    $region34: #{tpu_custom_call.1} parent=1 // pred_check
      _
    $region35: #{tpu_custom_call.1} parent=1 // pred_check_branch
      %63 = sbr.rel (0) target = $region37
    $region36: #{tpu_custom_call.1} parent=1 // pred_region
      %64 = dma.done [#allocation7], 256
    $region37: #{tpu_custom_call.1} parent=1 // pred_fallthru
      _
    // Predicated region
    $region38: #{tpu_custom_call.1} parent=1 // pred_check
      _
    $region39: #{tpu_custom_call.1} parent=1 // pred_check_branch
      %66 = sbr.rel (0) target = $region41
    $region40: #{tpu_custom_call.1} parent=1 // pred_region
      %67 = dma.done [#allocation7], 1024
    $region41: #{tpu_custom_call.1} parent=1 // pred_fallthru
      _
    %p69 = scmp.eq.s32.totalorder 0, 0
    // Predicated region
    $region42: #{tpu_custom_call.1} parent=1 // pred_check
      %p70 = pneg %p69
    $region43: #{tpu_custom_call.1} parent=1 // pred_check_branch
      %72 = sbr.rel (%p70) target = $region45
    $region44: #{tpu_custom_call.1} parent=1 // pred_region
      %v73 = vld [vmem:[#allocation3] sm:$0xff]
      %v74 = vld [vmem:[#allocation3 + $0x8] sm:$0xff]
      %vm75 = vcmask 261120
      %v76 = vsel %vm75, %v73, 0.0
      %77 = vadd.xlane.f32.xlu0 %v76
      %v78 = vpop.xlane.xlu0 %77
      %v79 = vsel %vm75, %v74, 0.0
      %80 = vadd.xlane.f32.xlu0 %v79
      %v81 = vpop.xlane.xlu0 %80
      %v82 = vrcp.pop 32.0
      %v83 = vmul.f32 %v78, %v82
      %v84 = vmul.f32 %v81, %v82
      %v85 = vsub.f32 %v73, %v83
      %v86 = vsub.f32 %v74, %v84
      %v87 = vmul.f32 %v85, %v85
      %v88 = vmul.f32 %v86, %v86
      %v89 = vsel %vm75, %v87, 0.0
      %90 = vadd.xlane.f32.xlu0 %v89
      %v91 = vpop.xlane.xlu0 %90
      %v92 = vsel %vm75, %v88, 0.0
      %93 = vadd.xlane.f32.xlu0 %v92
      %v94 = vpop.xlane.xlu0 %93
      %v95 = vmul.f32 %v91, %v82
      %v96 = vmul.f32 %v94, %v82
      %v97 = vadd.f32 %v95, 1e-05
      %v98 = vadd.f32 %v96, 1e-05
      %v99 = vrsqrt.pop %v97
      %v100 = vrsqrt.pop %v98
      %v101 = vmul.f32 %v85, %v99
      %v102 = vmul.f32 %v86, %v100
      %v103 = vld [vmem:[%s1] sm:$0x1]
      %v105 = vlaneseq
      %v106 = vshrl.u32 %v105, 7
      %v107 = vsub.s32 0, %v106
      %v108 = vrot.slane %v103, %v107
      %v110 = vmul.f32 %v101, %v108
      %v111 = vmul.f32 %v102, %v108
      %v112 = vld [vmem:[%s2] sm:$0x1]
      %v114 = vlaneseq
      %v115 = vshrl.u32 %v114, 7
      %v116 = vsub.s32 0, %v115
      %v117 = vrot.slane %v112, %v116
      %v119 = vadd.f32 %v110, %v117
      %v120 = vadd.f32 %v111, %v117
      %v121 = vpack.c.bf16 %v120, %v119
      %122 = vst.msk [vmem:[#allocation2] sm:$0xff] %vm75, %v121
      %123 = vst [vmem:[#allocation9] sm:$0xff] 0.0
      %124 = vst [vmem:[#allocation9 + $0x8] sm:$0xff] 0.0
    $region45: #{tpu_custom_call.1} parent=1 // pred_fallthru
      _
    %v125 = vld [vmem:[#allocation2] sm:$0xff]
    %v126 = vld [vmem:[#allocation6] sm:$0xf]
    %v127 = vld [vmem:[#allocation6 + $0x4] sm:$0xf]
    %v128 = vld [vmem:[#allocation6 + $0x8] sm:$0xf]
    %v129 = vld [vmem:[#allocation6 + $0xc] sm:$0xf]
    %v130 = vld [vmem:[%s4] sm:$0x1]
    %v132 = vlaneseq
    %v133 = vshrl.u32 %v132, 7
    %v134 = vsub.s32 0, %v133
    %v135 = vrot.slane %v130, %v134
    %v141 = vunpack.c.l.b16 %v126
    %v142 = vunpack.c.l.b16 %v127
    %v143 = vunpack.c.l.b16 %v128
    %v144 = vunpack.c.l.b16 %v129
    %v145 = vpack.c.b16 %v142, %v141
    %v146 = vpack.c.b16 %v144, %v143
    %vm149 = vcmask 261120
    %v151 = vsel %vm149, %v125, 0
    %153 = vmatprep.subr.bf16.mxu0 0
    %154 = vmatpush1.bf16.msra.mxu0 %v145
    %155 = vmatprep.subr.bf16.mxu0 0
    %156 = vmatpush1.bf16.msra.mxu0 %v146
    %157 = vmatprep.subr.bf16.mxu0 0
    %158 = vmatpush1.bf16.msra.mxu0 0
    %159 = vmatprep.subr.bf16.mxu0 0
    %160 = vmatpush1.bf16.msra.mxu0 0
    %161 = vmatprep.subr.bf16.mxu0 0
    %162 = vmatpush1.bf16.msra.mxu0 0
    %163 = vmatprep.subr.bf16.mxu0 0
    %164 = vmatpush1.bf16.msra.mxu0 0
    %165 = vmatprep.subr.bf16.mxu0 0
    %166 = vmatpush1.bf16.msra.mxu0 0
    %167 = vmatprep.subr.bf16.mxu0 0
    %168 = vmatpush1.bf16.msra.mxu0 0
    %169 = vmatprep.subr.bf16.mxu0 0
    %170 = vmatpush1.bf16.msra.mxu0 0
    %171 = vmatprep.subr.bf16.mxu0 0
    %172 = vmatpush1.bf16.msra.mxu0 0
    %173 = vmatprep.subr.bf16.mxu0 0
    %174 = vmatpush1.bf16.msra.mxu0 0
    %175 = vmatprep.subr.bf16.mxu0 0
    %176 = vmatpush1.bf16.msra.mxu0 0
    %177 = vmatprep.subr.bf16.mxu0 0
    %178 = vmatpush1.bf16.msra.mxu0 0
    %179 = vmatprep.subr.bf16.mxu0 0
    %180 = vmatpush1.bf16.msra.mxu0 0
    %181 = vmatprep.subr.bf16.mxu0 0
    %182 = vmatpush1.bf16.msra.mxu0 0
    %183 = vmatprep.subr.bf16.mxu0 0
    %184 = vmatpush1.bf16.msra.mxu0 0
    %185 = vmatprep.mubr.bf16.mxu0 0
    %186 = vmatmul.mubr.bf16.gmra.mrb[0].mxu0 %v151
    %v187 = vpop.f32.mrb[0].mxu0
    %v188 = vadd.f32 %v135, %v187
    %v189 = vpop.f32.mrb[0].mxu0
    %v190 = vpop.f32.mrb[0].mxu0
    %v191 = vadd.f32 %v135, %v190
    %v192 = vpop.f32.mrb[0].mxu0
    %193 = vdwg.mxu0
    %v194 = vmul.f32 %v188, 0.5
    %v195 = vmul.f32 %v191, 0.5
    %v196 = vmul.f32 %v188, 0.70710677
    %v197 = vmul.f32 %v191, 0.70710677
    %v198 = verf.f32.pop %v196
    %v199 = verf.f32.pop %v197
    %v200 = vadd.f32 %v198, 1.0
    %v201 = vadd.f32 %v199, 1.0
    %v202 = vmul.f32 %v194, %v200
    %v203 = vmul.f32 %v195, %v201
    %v204 = vld [vmem:[#allocation9] sm:$0xff]
    %v205 = vld [vmem:[#allocation9 + $0x8] sm:$0xff]
    %v206 = vpack.c.bf16 %v203, %v202
    %v207 = vld [vmem:[#allocation8] sm:$0xf]
    %v208 = vld [vmem:[#allocation8 + $0x4] sm:$0xf]
    %v209 = vld [vmem:[#allocation8 + $0x8] sm:$0xf]
    %v210 = vld [vmem:[#allocation8 + $0xc] sm:$0xf]
    %v211 = vld [vmem:[#allocation8 + $0x10] sm:$0xf]
    %v212 = vld [vmem:[#allocation8 + $0x14] sm:$0xf]
    %v213 = vld [vmem:[#allocation8 + $0x18] sm:$0xf]
    %v214 = vld [vmem:[#allocation8 + $0x1c] sm:$0xf]
    %v215 = vld [vmem:[#allocation8 + $0x20] sm:$0xf]
    %v216 = vld [vmem:[#allocation8 + $0x24] sm:$0xf]
    %v217 = vld [vmem:[#allocation8 + $0x28] sm:$0xf]
    %v218 = vld [vmem:[#allocation8 + $0x2c] sm:$0xf]
    %v219 = vld [vmem:[#allocation8 + $0x30] sm:$0xf]
    %v220 = vld [vmem:[#allocation8 + $0x34] sm:$0xf]
    %v221 = vld [vmem:[#allocation8 + $0x38] sm:$0xf]
    %v222 = vld [vmem:[#allocation8 + $0x3c] sm:$0xf]
    %v239 = vunpack.c.l.b16 %v207
    %v240 = vunpack.c.l.b16 %v208
    %v241 = vunpack.c.l.b16 %v209
    %v242 = vunpack.c.l.b16 %v210
    %v243 = vunpack.c.l.b16 %v211
    %v244 = vunpack.c.l.b16 %v212
    %v245 = vunpack.c.l.b16 %v213
    %v246 = vunpack.c.l.b16 %v214
    %v247 = vunpack.c.l.b16 %v215
    %v248 = vunpack.c.l.b16 %v216
    %v249 = vunpack.c.l.b16 %v217
    %v250 = vunpack.c.l.b16 %v218
    %v251 = vunpack.c.l.b16 %v219
    %v252 = vunpack.c.l.b16 %v220
    %v253 = vunpack.c.l.b16 %v221
    %v254 = vunpack.c.l.b16 %v222
    %v255 = vpack.c.b16 %v240, %v239
    %v256 = vpack.c.b16 %v242, %v241
    %v257 = vpack.c.b16 %v244, %v243
    %v258 = vpack.c.b16 %v246, %v245
    %v259 = vpack.c.b16 %v248, %v247
    %v260 = vpack.c.b16 %v250, %v249
    %v261 = vpack.c.b16 %v252, %v251
    %v262 = vpack.c.b16 %v254, %v253
    %271 = vmatprep.subr.bf16.mxu0 0
    %272 = vmatpush1.bf16.msra.mxu0 %v255
    %273 = vmatprep.subr.bf16.mxu0 0
    %274 = vmatpush1.bf16.msra.mxu0 %v256
    %275 = vmatprep.subr.bf16.mxu0 0
    %276 = vmatpush1.bf16.msra.mxu0 %v257
    %277 = vmatprep.subr.bf16.mxu0 0
    %278 = vmatpush1.bf16.msra.mxu0 %v258
    %279 = vmatprep.subr.bf16.mxu0 0
    %280 = vmatpush1.bf16.msra.mxu0 %v259
    %281 = vmatprep.subr.bf16.mxu0 0
    %282 = vmatpush1.bf16.msra.mxu0 %v260
    %283 = vmatprep.subr.bf16.mxu0 0
    %284 = vmatpush1.bf16.msra.mxu0 %v261
    %285 = vmatprep.subr.bf16.mxu0 0
    %286 = vmatpush1.bf16.msra.mxu0 %v262
    %287 = vmatprep.subr.bf16.mxu0 0
    %288 = vmatpush1.bf16.msra.mxu0 0
    %289 = vmatprep.subr.bf16.mxu0 0
    %290 = vmatpush1.bf16.msra.mxu0 0
    %291 = vmatprep.subr.bf16.mxu0 0
    %292 = vmatpush1.bf16.msra.mxu0 0
    %293 = vmatprep.subr.bf16.mxu0 0
    %294 = vmatpush1.bf16.msra.mxu0 0
    %295 = vmatprep.subr.bf16.mxu0 0
    %296 = vmatpush1.bf16.msra.mxu0 0
    %297 = vmatprep.subr.bf16.mxu0 0
    %298 = vmatpush1.bf16.msra.mxu0 0
    %299 = vmatprep.subr.bf16.mxu0 0
    %300 = vmatpush1.bf16.msra.mxu0 0
    %301 = vmatprep.subr.bf16.mxu0 0
    %302 = vmatpush1.bf16.msra.mxu0 0
    %303 = vmatprep.mubr.bf16.mxu0 0
    %304 = vmatmul.mubr.bf16.gmra.mrb[0].mxu0 %v206
    %v305 = vpop.f32.mrb[0].mxu0
    %v306 = vadd.f32 0.0, %v305
    %v307 = vpop.f32.mrb[0].mxu0
    %v308 = vpop.f32.mrb[0].mxu0
    %v309 = vadd.f32 0.0, %v308
    %v310 = vpop.f32.mrb[0].mxu0
    %311 = vdwg.mxu0
    %v312 = vadd.f32 %v204, %v306
    %v313 = vadd.f32 %v205, %v309
    %314 = vst [vmem:[#allocation9] sm:$0xff] %v312
    %315 = vst [vmem:[#allocation9 + $0x8] sm:$0xff] %v313
    // Predicated region
    $region46: #{tpu_custom_call.1} parent=1 // pred_check
      %p316 = pneg %p69
    $region47: #{tpu_custom_call.1} parent=1 // pred_check_branch
      %318 = sbr.rel (%p316) target = $region49
    $region48: #{tpu_custom_call.1} parent=1 // pred_region
      %v319 = vld [vmem:[#allocation9] sm:$0xff]
      %v320 = vld [vmem:[#allocation9 + $0x8] sm:$0xff]
      %v321 = vld [vmem:[%s6] sm:$0x1]
      %v323 = vlaneseq
      %v324 = vshrl.u32 %v323, 7
      %v325 = vsub.s32 0, %v324
      %v326 = vrot.slane %v321, %v325
      %v328 = vadd.f32 %v319, %v326
      %v329 = vadd.f32 %v320, %v326
      %330 = vst [vmem:[#allocation9] sm:$0xff] %v328
      %331 = vst [vmem:[#allocation9 + $0x8] sm:$0xff] %v329
    $region49: #{tpu_custom_call.1} parent=1 // pred_fallthru
      _
    // Predicated region
    $region50: #{tpu_custom_call.1} parent=1 // pred_check
      _
    $region51: #{tpu_custom_call.1} parent=1 // pred_check_branch
      %333 = sbr.rel (0) target = $region53
    $region52: #{tpu_custom_call.1} parent=1 // pred_region
      %s335 = ssub.s32 256, 256
      %336 = vsyncadd [#allocation5], %s335
      %s337 = sshll.u32 [#allocation9], 4
      %s338 = int_to_ptr.vmem [resolvable:$true] %s337
      %343 = dma.vmem_to_hbm [thread:$0]  %s338, 256, %s7, [#allocation5], 128, 128, 8
    $region53: #{tpu_custom_call.1} parent=1 // pred_fallthru
      _
    // Predicated region
    $region54: #{tpu_custom_call.1} parent=1 // pred_check
      _
    $region55: #{tpu_custom_call.1} parent=1 // pred_check_branch
      %345 = sbr.rel (0) target = $region57
    $region56: #{tpu_custom_call.1} parent=1 // pred_region
      %346 = dma.done [#allocation5], 256
    $region57: #{tpu_custom_call.1} parent=1 // pred_fallthru
      _
    %347 = vsyncpa [#allocation4], 1
    %348 = vsyncpa [#allocation7], 1
    %349 = vsyncpa [#allocation5], 1

</llo_original>
